<compile_context>
chip_gen: v7x
topology: tpu7x:2x2x1
jax: 0.10.0
libtpu: 0.0.40
codegen_flags: <defaults>
</compile_context>

<pallas_src>
import jax
import jax.numpy as jnp
from jax.experimental import pallas as pl
from jax.experimental.pallas import tpu as pltpu


def _cagroup_head_kernel(feat_ref, w1_ref, b1_ref, wout_ref, bout_ref, out_ref):
    """Fused per-point head in feature-major layout, one points-tile per step:
         h^T   = relu(W1^T @ feat^T + b1^T)      # [hidden, tile_n], f32 acc/VPU
         out^T = Wout^T @ h^T + bout^T           # [out_sub, tile_n], lane-dense
       Semantic / center-offset rows are split off in the wrapper."""
    h = jnp.dot(w1_ref[...], feat_ref[...],
                preferred_element_type=jnp.float32) + b1_ref[...]
    h = jnp.maximum(h, 0.0)
    out = jnp.dot(wout_ref[...], h.astype(wout_ref.dtype),
                  preferred_element_type=jnp.float32) + bout_ref[...]
    out_ref[...] = out.astype(out_ref.dtype)


def cagroup_head(xyz, feat, params, *, tile_n=2048, use_bf16=True):
    """xyz: [N, 3] f32, feat: [N, C_in] f32.
    Returns (semantic_logits [N, num_classes], vote_xyz [N, 3])."""
    N, c_in = feat.shape
    w1, b1 = params["w1"], params["b1"]
    ws, bs = params["ws"], params["bs"]
    wo, bo = params["wo"], params["bo"]
    hidden = w1.shape[1]
    num_classes = ws.shape[1]

    # Padded sublane width of the fused [sem | offset] head (11 -> 16).
    out_sub = ((num_classes + 3 + 7) // 8) * 8

    compute_dtype = jnp.bfloat16 if use_bf16 else jnp.float32

    # Feature-major inputs.  The transpose is required by the layout anyway, so
    # the bf16 cast is fused into that single XLA pass (no extra pad/cast pass).
    feat_t = feat.T.astype(compute_dtype)            # [c_in, N]
    w1_t = w1.T.astype(compute_dtype)                # [hidden, c_in]
    b1_t = b1.reshape(1, hidden).T                   # [hidden, 1] f32

    # Fused, transposed [Ws | Wo | 0-pad] head (bf16 feed for the 2nd matmul).
    wout_t = jnp.zeros((out_sub, hidden), jnp.float32)
    wout_t = wout_t.at[:num_classes, :].set(ws.T)
    wout_t = wout_t.at[num_classes:num_classes + 3, :].set(wo.T)
    wout_t = wout_t.astype(compute_dtype)            # [out_sub, hidden]
    bout_t = jnp.zeros((out_sub, 1), jnp.float32)
    bout_t = bout_t.at[:num_classes, 0].set(bs.reshape(-1))
    bout_t = bout_t.at[num_classes:num_classes + 3, 0].set(bo.reshape(-1))

    # tile_n is the lane dim -> keep it a multiple of 128; aim for >= 2 grid
    # steps so dimension_semantics=("parallel",) load-balances across v7x's
    # two TensorCores (v5e/v6e have one TC, no downside there).
    if N > 128:
        half_up = ((-(-N // 2) + 127) // 128) * 128
        tile_n = min(tile_n, half_up)
    tile_n = max(128, (tile_n // 128) * 128)
    n_tiles = pl.cdiv(N, tile_n)      # ragged last block handled by Pallas

    row_map = lambda i: (0, i)        # streamed per points-tile (lane dim)
    full_map = lambda i: (0, 0)       # VMEM-resident across the whole grid

    itemsize_in = jnp.dtype(compute_dtype).itemsize
    cost = pl.CostEstimate(
        flops=2 * N * (c_in * hidden + hidden * out_sub),
        transcendentals=0,
        bytes_accessed=(N * c_in * itemsize_in                 # feat read
                        + out_sub * N * 4                      # out write
                        + (hidden * c_in + out_sub * hidden) * itemsize_in
                        + (hidden + out_sub) * 4),
    )

    out_t = pl.pallas_call(
        _cagroup_head_kernel,
        out_shape=jax.ShapeDtypeStruct((out_sub, N), jnp.float32),
        grid_spec=pltpu.PrefetchScalarGridSpec(
            num_scalar_prefetch=0,
            grid=(n_tiles,),
            in_specs=[
                pl.BlockSpec((c_in, tile_n), row_map),      # feat^T (streamed)
                pl.BlockSpec((hidden, c_in), full_map),     # W1^T
                pl.BlockSpec((hidden, 1), full_map),        # b1^T
                pl.BlockSpec((out_sub, hidden), full_map),  # fused [Ws|Wo]^T
                pl.BlockSpec((out_sub, 1), full_map),       # fused [bs|bo]^T
            ],
            out_specs=pl.BlockSpec((out_sub, tile_n), row_map),
        ),
        compiler_params=pltpu.CompilerParams(
            dimension_semantics=("parallel",)),  # shards over v7x's 2 TCs
        cost_estimate=cost,
    )(feat_t, w1_t, b1_t, wout_t, bout_t)

    # Narrow (16 x N) result: slices/transposes below are cheap XLA ops.
    sem = out_t[:num_classes, :].T                    # [N, num_classes]
    off = out_t[num_classes:num_classes + 3, :].T     # [N, 3]
    vote = xyz + off
    return sem, vote


def init_params(key, c_in, hidden, num_classes):
    k1, k2, k3 = jax.random.split(key, 3)
    scale1 = 1.0 / jnp.sqrt(c_in)
    scale2 = 1.0 / jnp.sqrt(hidden)
    return {
        "w1": jax.random.normal(k1, (c_in, hidden), jnp.float32) * scale1,
        "b1": jnp.zeros((1, hidden), jnp.float32),
        "ws": jax.random.normal(k2, (hidden, num_classes), jnp.float32) * scale2,
        "bs": jnp.zeros((1, num_classes), jnp.float32),
        "wo": jax.random.normal(k3, (hidden, 3), jnp.float32) * scale2,
        "bo": jnp.zeros((1, 3), jnp.float32),
    }


def cagroup3d_wrapper_forward(batch_dict, params, *, use_bf16=True):
    """Mirrors CAGroup3DWrapper.forward(batch_dict): dict in, dict out."""
    points = batch_dict["points"]            # [N, 3 + C_in]
    xyz = points[:, :3]
    feat = points[:, 3:]
    sem, vote = cagroup_head(xyz, feat, params, use_bf16=use_bf16)
    out = dict(batch_dict)
    out["semantic_scores"] = sem             # [N, num_classes]
    out["vote_xyz"] = vote                   # [N, 3]
    return out


def reference_forward(batch_dict, params, *, use_bf16=True):
    """Pure-JAX reference with the same input quantization as the kernel."""
    points = batch_dict["points"]
    xyz = points[:, :3]
    feat = points[:, 3:]
    cdt = jnp.bfloat16 if use_bf16 else jnp.float32
    h = jnp.dot(feat.astype(cdt), params["w1"].astype(cdt),
                preferred_element_type=jnp.float32) + params["b1"]
    h = jnp.maximum(h, 0.0)
    hc = h.astype(cdt)
    sem = jnp.dot(hc, params["ws"].astype(cdt),
                  preferred_element_type=jnp.float32) + params["bs"]
    off = jnp.dot(hc, params["wo"].astype(cdt),
                  preferred_element_type=jnp.float32) + params["bo"]
    return sem, xyz + off


if __name__ == "__main__":
    key = jax.random.PRNGKey(0)
    k_pts, k_par = jax.random.split(key)

    N = 2000         # number of points (deliberately NOT a multiple of tile_n)
    C_IN = 32        # per-point feature channels
    HIDDEN = 64      # shared-MLP hidden width
    NUM_CLASSES = 8  # semantic classes

    points = jax.random.normal(k_pts, (N, 3 + C_IN), jnp.float32)
    params = init_params(k_par, C_IN, HIDDEN, NUM_CLASSES)
    batch_dict = {"points": points}

    # Default (bf16-streamed) path.
    out = cagroup3d_wrapper_forward(batch_dict, params, use_bf16=True)
    sem = jax.block_until_ready(out["semantic_scores"])
    vote = jax.block_until_ready(out["vote_xyz"])
    ref_sem, ref_vote = reference_forward(batch_dict, params, use_bf16=True)
    assert sem.shape == (N, NUM_CLASSES) and vote.shape == (N, 3)
    assert jnp.allclose(sem, ref_sem, atol=1e-2, rtol=1e-2)
    assert jnp.allclose(vote, ref_vote, atol=1e-2, rtol=1e-2)

    # Full-f32 path (tighter tolerance).
    out32 = cagroup3d_wrapper_forward(batch_dict, params, use_bf16=False)
    sem32 = jax.block_until_ready(out32["semantic_scores"])
    vote32 = jax.block_until_ready(out32["vote_xyz"])
    ref_sem32, ref_vote32 = reference_forward(batch_dict, params, use_bf16=False)
    assert jnp.allclose(sem32, ref_sem32, atol=1e-3, rtol=1e-3)
    assert jnp.allclose(vote32, ref_vote32, atol=1e-3, rtol=1e-3)

    print("KERNEL_OK")
</pallas_src>

<mosaic_0001>
module attributes {stable_mosaic.version = 11 : i64} {
  func.func @_cagroup_head_kernel(%arg0: i32, %arg1: memref<32x1024xbf16, #tpu.memory_space<vmem>>, %arg2: memref<64x32xbf16, #tpu.memory_space<vmem>>, %arg3: memref<64x1xf32, #tpu.memory_space<vmem>>, %arg4: memref<16x64xbf16, #tpu.memory_space<vmem>>, %arg5: memref<16x1xf32, #tpu.memory_space<vmem>>, %arg6: memref<16x1024xf32, #tpu.memory_space<vmem>>) attributes {dimension_semantics = [#tpu.dimension_semantics<parallel>], iteration_bounds = array<i64: 2>, scalar_prefetch = 0 : i64, scratch_operands = 0 : i64, tpu.core_type = #tpu.core_type<tc>, window_params = [{transform_indices = @transform_0, window_bounds = array<i64: 32, 1024>}, {pipeline_mode = #tpu.pipeline_mode<synchronous>, transform_indices = @transform_1, window_bounds = array<i64: 64, 32>}, {pipeline_mode = #tpu.pipeline_mode<synchronous>, transform_indices = @transform_2, window_bounds = array<i64: 64, 1>}, {pipeline_mode = #tpu.pipeline_mode<synchronous>, transform_indices = @transform_3, window_bounds = array<i64: 16, 64>}, {pipeline_mode = #tpu.pipeline_mode<synchronous>, transform_indices = @transform_4, window_bounds = array<i64: 16, 1>}, {transform_indices = @transform_5, window_bounds = array<i64: 16, 1024>}]} {
    %c0 = arith.constant 0 : index
    %c0_0 = arith.constant 0 : index
    %0 = vector.load %arg2[%c0, %c0_0] : memref<64x32xbf16, #tpu.memory_space<vmem>>, vector<64x32xbf16>
    %c0_1 = arith.constant 0 : index
    %c0_2 = arith.constant 0 : index
    %1 = vector.load %arg1[%c0_1, %c0_2] : memref<32x1024xbf16, #tpu.memory_space<vmem>>, vector<32x1024xbf16>
    %cst = arith.constant dense<0.000000e+00> : vector<64x1024xf32>
    %2 = tpu.matmul %0, %1, %cst {dimension_numbers = #tpu.dot_dimension_numbers<[1], [0], [0], [1], [0, 0, 1, 1], [], []>} : vector<64x32xbf16>, vector<32x1024xbf16>, vector<64x1024xf32> -> vector<64x1024xf32>
    %c0_3 = arith.constant 0 : index
    %c0_4 = arith.constant 0 : index
    %3 = vector.load %arg3[%c0_3, %c0_4] : memref<64x1xf32, #tpu.memory_space<vmem>>, vector<64x1xf32>
    %4 = vector.broadcast %3 : vector<64x1xf32> to vector<64x1024xf32>
    %5 = arith.addf %2, %4 : vector<64x1024xf32>
    %cst_5 = arith.constant 0.000000e+00 : f32
    %6 = vector.broadcast %cst_5 : f32 to vector<64x1024xf32>
    %7 = arith.maximumf %5, %6 : vector<64x1024xf32>
    %c0_6 = arith.constant 0 : index
    %c0_7 = arith.constant 0 : index
    %8 = vector.load %arg4[%c0_6, %c0_7] : memref<16x64xbf16, #tpu.memory_space<vmem>>, vector<16x64xbf16>
    %9 = arith.truncf %7 : vector<64x1024xf32> to vector<64x1024xbf16>
    %cst_8 = arith.constant dense<0.000000e+00> : vector<16x1024xf32>
    %10 = tpu.matmul %8, %9, %cst_8 {dimension_numbers = #tpu.dot_dimension_numbers<[1], [0], [0], [1], [0, 0, 1, 1], [], []>} : vector<16x64xbf16>, vector<64x1024xbf16>, vector<16x1024xf32> -> vector<16x1024xf32>
    %c0_9 = arith.constant 0 : index
    %c0_10 = arith.constant 0 : index
    %11 = vector.load %arg5[%c0_9, %c0_10] : memref<16x1xf32, #tpu.memory_space<vmem>>, vector<16x1xf32>
    %12 = vector.broadcast %11 : vector<16x1xf32> to vector<16x1024xf32>
    %13 = arith.addf %10, %12 : vector<16x1024xf32>
    %c0_11 = arith.constant 0 : index
    %c0_12 = arith.constant 0 : index
    %14 = vector.load %arg6[%c0_11, %c0_12] : memref<16x1024xf32, #tpu.memory_space<vmem>>, vector<16x1024xf32>
    tpu.vector_store %arg6[%c0_11, %c0_12], %13 {strides = array<i32>} : memref<16x1024xf32, #tpu.memory_space<vmem>>, vector<16x1024xf32>,
    return
  }
  func.func @transform_0(%arg0: i32) -> (i32, i32) {
    %c0_i32 = arith.constant 0 : i32
    %c0_i32_0 = arith.constant 0 : i32
    return %c0_i32, %arg0 : i32, i32
  }
  func.func @transform_1(%arg0: i32) -> (i32, i32) {
    %c0_i32 = arith.constant 0 : i32
    %c0_i32_0 = arith.constant 0 : i32
    %c0_i32_1 = arith.constant 0 : i32
    return %c0_i32, %c0_i32_0 : i32, i32
  }
  func.func @transform_2(%arg0: i32) -> (i32, i32) {
    %c0_i32 = arith.constant 0 : i32
    %c0_i32_0 = arith.constant 0 : i32
    %c0_i32_1 = arith.constant 0 : i32
    return %c0_i32, %c0_i32_0 : i32, i32
  }
  func.func @transform_3(%arg0: i32) -> (i32, i32) {
    %c0_i32 = arith.constant 0 : i32
    %c0_i32_0 = arith.constant 0 : i32
    %c0_i32_1 = arith.constant 0 : i32
    return %c0_i32, %c0_i32_0 : i32, i32
  }
  func.func @transform_4(%arg0: i32) -> (i32, i32) {
    %c0_i32 = arith.constant 0 : i32
    %c0_i32_0 = arith.constant 0 : i32
    %c0_i32_1 = arith.constant 0 : i32
    return %c0_i32, %c0_i32_0 : i32, i32
  }
  func.func @transform_5(%arg0: i32) -> (i32, i32) {
    %c0_i32 = arith.constant 0 : i32
    %c0_i32_0 = arith.constant 0 : i32
    return %c0_i32, %arg0 : i32, i32
  }
}

</mosaic_0001>

<llo_original>
// kernel: tpu_custom_call.1
$region0: #{tpu_custom_call.1}
  #allocation0 [shape = 'u32[]', space=smem, size = 0x4, offset = 0x4, fixed_abs, tag = 'smem constant byte address 0x4 - core index']
  #allocation1 [shape = 'u32[144,128]{1,0:T(1,128)}', space=vmem, size = 0x12000, scoped, tag = 'internal scratch']
  %s0 = inlined_call_operand.hbm [shape: bf16[32,2000], index: 0, kind: input, shape index: {}]
  %s1 = inlined_call_operand.vmem [shape: bf16[64,32], index: 1, kind: input, shape index: {}]
  %s2 = inlined_call_operand.vmem [shape: f32[64,1], index: 2, kind: input, shape index: {}]
  %s3 = inlined_call_operand.vmem [shape: bf16[16,64], index: 3, kind: input, shape index: {}]
  %s4 = inlined_call_operand.vmem [shape: f32[16,1], index: 4, kind: input, shape index: {}]
  %s5 = inlined_call_operand.hbm [shape: f32[16,2000], index: 5, kind: output, shape index: {}]
  %s6 = sld [smem:[#allocation0]]
  $region57: #{tpu_custom_call.1} parent=0
    _
  %s8 = ssub.s32 1, %s6
  %s9 = scalar_select 0, %s8, %s6
  $region1: #{tpu_custom_call.1} parent=0
    #allocation2 [shape = 'u8[131072]{0}', space=vmem, size = 0x20000, scoped, tag = 'input window, operand 0']
    #allocation3 [shape = 's32[2]{0}', space=sflag, size = 0x8, scoped, tag = 'scoped memory for tpu_custom_call.1']
    #allocation4 [shape = 's32[2]{0}', space=sflag, size = 0x8, scoped, tag = 'scoped memory for tpu_custom_call.1']
    #allocation5 [shape = 'u8[131072]{0}', space=vmem, size = 0x20000, scoped, tag = 'output window, operand 0']
    %10 = vsyncpa [#allocation3], 0
    %s11 = scalar_lea.sflag [#allocation3], 1
    %12 = vsyncpa %s11, 0
    %13 = vsyncpa [#allocation4], 0
    %s14 = scalar_lea.sflag [#allocation4], 1
    %15 = vsyncpa %s14, 0
    loop: start=0, step=1, limit=4
    $region2: #{tpu_custom_call.1} parent=1 // loop_pre_header
      _
    $region3: #{tpu_custom_call.1} parent=1 // loop_header
      %s17 = sphi 0, %s21
      %p18 = scmp.ge.s32.totalorder %s17, 4
      %s27 = sphi 0, %s29
      %s30 = sphi 0, %s27
      %s31 = sphi 0, %s30
      %s47 = sphi 0, %s31
      %s51 = sphi 0, %s51
      %s53 = sphi 0, %s51
      %s54 = sphi 0, %s53
      %s68 = sphi 0, %s54
      %s72 = sphi 0, %s72
      %s74 = sphi 0, %s72
      %s75 = sphi 0, %s74
      %s89 = sphi 0, %s75
      %s93 = sphi 0, %s93
      %s95 = sphi 0, %s93
      %s96 = sphi 0, %s95
      %s110 = sphi 0, %s96
      %s114 = sphi 0, %s114
      %s116 = sphi 0, %s114
      %s117 = sphi 0, %s116
      %s131 = sphi 0, %s117
      %s137 = sphi 0, %s139
      %s140 = sphi 0, %s137
      %s141 = sphi 0, %s140
      %s157 = sphi 0, %s141
    $region4: #{tpu_custom_call.1} parent=1 // loop_header_branch
      %20 = sbr.rel (%p18) target = $region8
    $region5: #{tpu_custom_call.1} parent=1 // loop_body
      %s22 = ssub.s32 %s17, 1
      %s23 = ssub.s32 %s17, 2
      %s24 = sadd.s32 %s17, 1
      %s25 = ssub.s32 %s17, %s24
      %p26 = scmp.eq.s32.totalorder %s25, 0
      %s28 = sadd.s32 %s27, 1
      %s29 = scalar_select %p26, %s27, %s28
      %p32 = pneg %p26
      %p33 = scmp.eq.s32.totalorder %s17, 1
      %p34 = por %p32, %p33
      %p35 = scmp.ne.s32.totalorder %s27, %s30
      %p36 = scmp.eq.s32.totalorder %s17, 0
      %p37 = por %p35, %p36
      %p38 = scmp.ne.s32.totalorder %s27, %s30
      %p39 = scmp.eq.s32.totalorder %s22, 1
      %p40 = por %p38, %p39
      %p41 = scmp.ne.s32.totalorder %s30, %s31
      %p42 = scmp.eq.s32.totalorder %s22, 0
      %p43 = por %p41, %p42
      %p44 = scmp.ne.s32.totalorder %s30, %s31
      %p45 = scmp.eq.s32.totalorder %s23, 1
      %p46 = por %p44, %p45
      %p48 = scmp.ne.s32.totalorder %s31, %s47
      %p49 = scmp.eq.s32.totalorder %s23, 0
      %p50 = por %p48, %p49
      %s52 = sadd.s32 %s51, 1
      %p55 = scmp.eq.s32.totalorder %s17, 1
      %p56 = scmp.ne.s32.totalorder %s51, %s53
      %p57 = scmp.eq.s32.totalorder %s17, 0
      %p58 = por %p56, %p57
      %p59 = scmp.ne.s32.totalorder %s51, %s53
      %p60 = scmp.eq.s32.totalorder %s22, 1
      %p61 = por %p59, %p60
      %p62 = scmp.ne.s32.totalorder %s53, %s54
      %p63 = scmp.eq.s32.totalorder %s22, 0
      %p64 = por %p62, %p63
      %p65 = scmp.ne.s32.totalorder %s53, %s54
      %p66 = scmp.eq.s32.totalorder %s23, 1
      %p67 = por %p65, %p66
      %p69 = scmp.ne.s32.totalorder %s54, %s68
      %p70 = scmp.eq.s32.totalorder %s23, 0
      %p71 = por %p69, %p70
      %s73 = sadd.s32 %s72, 1
      %p76 = scmp.eq.s32.totalorder %s17, 1
      %p77 = scmp.ne.s32.totalorder %s72, %s74
      %p78 = scmp.eq.s32.totalorder %s17, 0
      %p79 = por %p77, %p78
      %p80 = scmp.ne.s32.totalorder %s72, %s74
      %p81 = scmp.eq.s32.totalorder %s22, 1
      %p82 = por %p80, %p81
      %p83 = scmp.ne.s32.totalorder %s74, %s75
      %p84 = scmp.eq.s32.totalorder %s22, 0
      %p85 = por %p83, %p84
      %p86 = scmp.ne.s32.totalorder %s74, %s75
      %p87 = scmp.eq.s32.totalorder %s23, 1
      %p88 = por %p86, %p87
      %p90 = scmp.ne.s32.totalorder %s75, %s89
      %p91 = scmp.eq.s32.totalorder %s23, 0
      %p92 = por %p90, %p91
      %s94 = sadd.s32 %s93, 1
      %p97 = scmp.eq.s32.totalorder %s17, 1
      %p98 = scmp.ne.s32.totalorder %s93, %s95
      %p99 = scmp.eq.s32.totalorder %s17, 0
      %p100 = por %p98, %p99
      %p101 = scmp.ne.s32.totalorder %s93, %s95
      %p102 = scmp.eq.s32.totalorder %s22, 1
      %p103 = por %p101, %p102
      %p104 = scmp.ne.s32.totalorder %s95, %s96
      %p105 = scmp.eq.s32.totalorder %s22, 0
      %p106 = por %p104, %p105
      %p107 = scmp.ne.s32.totalorder %s95, %s96
      %p108 = scmp.eq.s32.totalorder %s23, 1
      %p109 = por %p107, %p108
      %p111 = scmp.ne.s32.totalorder %s96, %s110
      %p112 = scmp.eq.s32.totalorder %s23, 0
      %p113 = por %p111, %p112
      %s115 = sadd.s32 %s114, 1
      %p118 = scmp.eq.s32.totalorder %s17, 1
      %p119 = scmp.ne.s32.totalorder %s114, %s116
      %p120 = scmp.eq.s32.totalorder %s17, 0
      %p121 = por %p119, %p120
      %p122 = scmp.ne.s32.totalorder %s114, %s116
      %p123 = scmp.eq.s32.totalorder %s22, 1
      %p124 = por %p122, %p123
      %p125 = scmp.ne.s32.totalorder %s116, %s117
      %p126 = scmp.eq.s32.totalorder %s22, 0
      %p127 = por %p125, %p126
      %p128 = scmp.ne.s32.totalorder %s116, %s117
      %p129 = scmp.eq.s32.totalorder %s23, 1
      %p130 = por %p128, %p129
      %p132 = scmp.ne.s32.totalorder %s117, %s131
      %p133 = scmp.eq.s32.totalorder %s23, 0
      %p134 = por %p132, %p133
      %s135 = ssub.s32 %s17, %s24
      %p136 = scmp.eq.s32.totalorder %s135, 0
      %s138 = sadd.s32 %s137, 1
      %s139 = scalar_select %p136, %s137, %s138
      %p142 = pneg %p136
      %p143 = scmp.eq.s32.totalorder %s17, 1
      %p144 = por %p142, %p143
      %p145 = scmp.ne.s32.totalorder %s137, %s140
      %p146 = scmp.eq.s32.totalorder %s17, 0
      %p147 = por %p145, %p146
      %p148 = scmp.ne.s32.totalorder %s137, %s140
      %p149 = scmp.eq.s32.totalorder %s22, 1
      %p150 = por %p148, %p149
      %p151 = scmp.ne.s32.totalorder %s140, %s141
      %p152 = scmp.eq.s32.totalorder %s22, 0
      %p153 = por %p151, %p152
      %p154 = scmp.ne.s32.totalorder %s140, %s141
      %p155 = scmp.eq.s32.totalorder %s23, 1
      %p156 = por %p154, %p155
      %p158 = scmp.ne.s32.totalorder %s141, %s157
      %p159 = scmp.eq.s32.totalorder %s23, 0
      %p160 = por %p158, %p159
      %p161 = scmp.le.s32.totalorder 1, %s17
      %p162 = scmp.lt.s32.totalorder %s17, 3
      %p163 = pnand %p161, %p162
      %p164 = pneg %p163
      // Predicated region
      $region9: #{tpu_custom_call.1} parent=5 // pred_check
        _
      $region10: #{tpu_custom_call.1} parent=5 // pred_check_branch
        %166 = sbr.rel (%p163) target = $region12
      $region11: #{tpu_custom_call.1} parent=5 // pred_region
        %s167 = ssub.s32 %s17, 1
        // Predicated region
        $region13: #{tpu_custom_call.1} parent=11 // pred_check
          %p168 = pneg %p64
        $region14: #{tpu_custom_call.1} parent=11 // pred_check_branch
          %170 = sbr.rel (%p168) target = $region16
        $region15: #{tpu_custom_call.1} parent=11 // pred_region
          _
        $region16: #{tpu_custom_call.1} parent=11 // pred_fallthru
          _
        // Predicated region
        $region17: #{tpu_custom_call.1} parent=11 // pred_check
          %p171 = pneg %p85
        $region18: #{tpu_custom_call.1} parent=11 // pred_check_branch
          %173 = sbr.rel (%p171) target = $region20
        $region19: #{tpu_custom_call.1} parent=11 // pred_region
          _
        $region20: #{tpu_custom_call.1} parent=11 // pred_fallthru
          _
        // Predicated region
        $region21: #{tpu_custom_call.1} parent=11 // pred_check
          %p174 = pneg %p106
        $region22: #{tpu_custom_call.1} parent=11 // pred_check_branch
          %176 = sbr.rel (%p174) target = $region24
        $region23: #{tpu_custom_call.1} parent=11 // pred_region
          _
        $region24: #{tpu_custom_call.1} parent=11 // pred_fallthru
          _
        // Predicated region
        $region25: #{tpu_custom_call.1} parent=11 // pred_check
          %p177 = pneg %p127
        $region26: #{tpu_custom_call.1} parent=11 // pred_check_branch
          %179 = sbr.rel (%p177) target = $region28
        $region27: #{tpu_custom_call.1} parent=11 // pred_region
          _
        $region28: #{tpu_custom_call.1} parent=11 // pred_fallthru
          _
      $region12: #{tpu_custom_call.1} parent=5 // pred_fallthru
        _
      %p180 = scmp.lt.s32.totalorder %s17, 2
      // Predicated region
      $region29: #{tpu_custom_call.1} parent=5 // pred_check
        %p181 = pneg %p180
      $region30: #{tpu_custom_call.1} parent=5 // pred_check_branch
        %183 = sbr.rel (%p181) target = $region32
      $region31: #{tpu_custom_call.1} parent=5 // pred_region
        // Predicated region
        $region33: #{tpu_custom_call.1} parent=31 // pred_check
          %p184 = pneg %p37
        $region34: #{tpu_custom_call.1} parent=31 // pred_check_branch
          %186 = sbr.rel (%p184) target = $region36
        $region35: #{tpu_custom_call.1} parent=31 // pred_region
          %s187 = sand.u32 %s27, 1
          %s188 = scalar_lea.sflag [#allocation3], %s187
          %s189 = sand.u32 %s27, 1
          %s190 = smul.addr %s189, 128
          %s191 = scalar_lea.vmem [#allocation2], %s190
          %s192 = smul.u32 8, %s17
          %s194 = ssub.s32 2048, 2048
          %195 = vsyncadd %s188, %s194
          %s196 = smul.addr %s192, 64
          %s197 = scalar_lea.hbm %s0, %s196
          %s198 = sshll.u32 %s191, 4
          %s199 = int_to_ptr.vmem [resolvable:$true] %s198
          %204 = dma.hbm_to_vmem [thread:$0]  %s197, 2048, %s199, %s188, 1024, 512, 32
        $region36: #{tpu_custom_call.1} parent=31 // pred_fallthru
          _
      $region32: #{tpu_custom_call.1} parent=5 // pred_fallthru
        _
      %p205 = scmp.le.s32.totalorder 1, %s17
      %p206 = scmp.lt.s32.totalorder %s17, 3
      %p207 = pnand %p205, %p206
      %p208 = pneg %p207
      // Predicated region
      $region37: #{tpu_custom_call.1} parent=5 // pred_check
        _
      $region38: #{tpu_custom_call.1} parent=5 // pred_check_branch
        %210 = sbr.rel (%p207) target = $region40
      $region39: #{tpu_custom_call.1} parent=5 // pred_region
        %s211 = ssub.s32 %s17, 1
        %s212 = sand.u32 %s30, 1
        %s213 = scalar_lea.sflag [#allocation3], %s212
        %s214 = sand.u32 %s30, 1
        %s215 = smul.addr %s214, 128
        %s216 = scalar_lea.vmem [#allocation2], %s215
        // Predicated region
        $region41: #{tpu_custom_call.1} parent=39 // pred_check
          %p217 = pneg %p43
        $region42: #{tpu_custom_call.1} parent=39 // pred_check_branch
          %219 = sbr.rel (%p217) target = $region44
        $region43: #{tpu_custom_call.1} parent=39 // pred_region
          %220 = dma.done %s213, 2048
        $region44: #{tpu_custom_call.1} parent=39 // pred_fallthru
          _
        %s221 = sand.u32 %s30, 1
        %s222 = scalar_lea.sflag [#allocation3], %s221
        %s223 = sand.u32 %s30, 1
        %s224 = smul.addr %s223, 128
        %s225 = scalar_lea.vmem [#allocation2], %s224
        %p226 = pneg %p43
        %p227 = pneg %p40
        %p228 = pneg %p64
        %p229 = pneg %p61
        %p230 = pneg %p85
        %p231 = pneg %p82
        %p232 = pneg %p106
        %p233 = pneg %p103
        %p234 = pneg %p127
        %p235 = pneg %p124
        %p236 = pneg %p153
        %p237 = pneg %p150
        %s238 = sand.u32 %s140, 1
        %s239 = scalar_lea.sflag [#allocation4], %s238
        %s240 = sand.u32 %s140, 1
        %s241 = smul.addr %s240, 128
        %s242 = scalar_lea.vmem [#allocation5], %s241
        %s243 = smul.u32 8, %s22
        %s244 = smul.u32 8, %s22
        %v246 = vld [vmem:[%s1] sm:$0xf]
        %v247 = vld [vmem:[%s1 + $0x4] sm:$0xf]
        %v248 = vld [vmem:[%s1 + $0x8] sm:$0xf]
        %v249 = vld [vmem:[%s1 + $0xc] sm:$0xf]
        %v250 = vld [vmem:[%s1 + $0x10] sm:$0xf]
        %v251 = vld [vmem:[%s1 + $0x14] sm:$0xf]
        %v252 = vld [vmem:[%s1 + $0x18] sm:$0xf]
        %v253 = vld [vmem:[%s1 + $0x1c] sm:$0xf]
        %v254 = vld [vmem:[%s216] sm:$0xff]
        %v255 = vld [vmem:[%s216 + $0x8] sm:$0xff]
        %v256 = vld [vmem:[%s216 + $0x10] sm:$0xff]
        %v257 = vld [vmem:[%s216 + $0x18] sm:$0xff]
        %v258 = vld [vmem:[%s216 + $0x20] sm:$0xff]
        %v259 = vld [vmem:[%s216 + $0x28] sm:$0xff]
        %v260 = vld [vmem:[%s216 + $0x30] sm:$0xff]
        %v261 = vld [vmem:[%s216 + $0x38] sm:$0xff]
        %v262 = vld [vmem:[%s216 + $0x40] sm:$0xff]
        %v263 = vld [vmem:[%s216 + $0x48] sm:$0xff]
        %v264 = vld [vmem:[%s216 + $0x50] sm:$0xff]
        %v265 = vld [vmem:[%s216 + $0x58] sm:$0xff]
        %v266 = vld [vmem:[%s216 + $0x60] sm:$0xff]
        %v267 = vld [vmem:[%s216 + $0x68] sm:$0xff]
        %v268 = vld [vmem:[%s216 + $0x70] sm:$0xff]
        %v269 = vld [vmem:[%s216 + $0x78] sm:$0xff]
        %v270 = vld [vmem:[%s2] sm:$0xff]
        %v271 = vld [vmem:[%s2 + $0x8] sm:$0xff]
        %v272 = vld [vmem:[%s2 + $0x10] sm:$0xff]
        %v273 = vld [vmem:[%s2 + $0x18] sm:$0xff]
        %v274 = vld [vmem:[%s2 + $0x20] sm:$0xff]
        %v275 = vld [vmem:[%s2 + $0x28] sm:$0xff]
        %v276 = vld [vmem:[%s2 + $0x30] sm:$0xff]
        %v277 = vld [vmem:[%s2 + $0x38] sm:$0xff]
        %279 = vset.pattern.permute.xlu0 0
        %280 = vperm.xlu0 %279, %v270
        %v281 = vpop.permute.xlu0 %280
        %284 = vset.pattern.permute.xlu0 0
        %285 = vperm.xlu0 %284, %v271
        %v286 = vpop.permute.xlu0 %285
        %289 = vset.pattern.permute.xlu0 0
        %290 = vperm.xlu0 %289, %v272
        %v291 = vpop.permute.xlu0 %290
        %294 = vset.pattern.permute.xlu0 0
        %295 = vperm.xlu0 %294, %v273
        %v296 = vpop.permute.xlu0 %295
        %299 = vset.pattern.permute.xlu0 0
        %300 = vperm.xlu0 %299, %v274
        %v301 = vpop.permute.xlu0 %300
        %304 = vset.pattern.permute.xlu0 0
        %305 = vperm.xlu0 %304, %v275
        %v306 = vpop.permute.xlu0 %305
        %309 = vset.pattern.permute.xlu0 0
        %310 = vperm.xlu0 %309, %v276
        %v311 = vpop.permute.xlu0 %310
        %314 = vset.pattern.permute.xlu0 0
        %315 = vperm.xlu0 %314, %v277
        %v316 = vpop.permute.xlu0 %315
        %v326 = vunpack.c.l.b16 %v246
        %v327 = vunpack.c.l.b16 %v247
        %v328 = vunpack.c.l.b16 %v248
        %v329 = vunpack.c.l.b16 %v249
        %v330 = vunpack.c.l.b16 %v250
        %v331 = vunpack.c.l.b16 %v251
        %v332 = vunpack.c.l.b16 %v252
        %v333 = vunpack.c.l.b16 %v253
        %v334 = vpack.c.b16 %v327, %v326
        %v335 = vpack.c.b16 %v329, %v328
        %v336 = vpack.c.b16 %v331, %v330
        %v337 = vpack.c.b16 %v333, %v332
        %v354 = vunpack.c.l.b16 %v254
        %v355 = vunpack.c.h.b16 %v254
        %v356 = vunpack.c.l.b16 %v255
        %v357 = vunpack.c.h.b16 %v255
        %v358 = vunpack.c.l.b16 %v256
        %v359 = vunpack.c.h.b16 %v256
        %v360 = vunpack.c.l.b16 %v257
        %v361 = vunpack.c.h.b16 %v257
        %v362 = vunpack.c.l.b16 %v258
        %v363 = vunpack.c.h.b16 %v258
        %v364 = vunpack.c.l.b16 %v259
        %v365 = vunpack.c.h.b16 %v259
        %v366 = vunpack.c.l.b16 %v260
        %v367 = vunpack.c.h.b16 %v260
        %v368 = vunpack.c.l.b16 %v261
        %v369 = vunpack.c.h.b16 %v261
        %v370 = vunpack.c.l.b16 %v262
        %v371 = vunpack.c.h.b16 %v262
        %v372 = vunpack.c.l.b16 %v263
        %v373 = vunpack.c.h.b16 %v263
        %v374 = vunpack.c.l.b16 %v264
        %v375 = vunpack.c.h.b16 %v264
        %v376 = vunpack.c.l.b16 %v265
        %v377 = vunpack.c.h.b16 %v265
        %v378 = vunpack.c.l.b16 %v266
        %v379 = vunpack.c.h.b16 %v266
        %v380 = vunpack.c.l.b16 %v267
        %v381 = vunpack.c.h.b16 %v267
        %v382 = vunpack.c.l.b16 %v268
        %v383 = vunpack.c.h.b16 %v268
        %v384 = vunpack.c.l.b16 %v269
        %v385 = vunpack.c.h.b16 %v269
        %v386 = vpack.c.b16 %v362, %v354
        %v387 = vpack.c.b16 %v363, %v355
        %v388 = vpack.c.b16 %v364, %v356
        %v389 = vpack.c.b16 %v365, %v357
        %v390 = vpack.c.b16 %v366, %v358
        %v391 = vpack.c.b16 %v367, %v359
        %v392 = vpack.c.b16 %v368, %v360
        %v393 = vpack.c.b16 %v369, %v361
        %v394 = vpack.c.b16 %v378, %v370
        %v395 = vpack.c.b16 %v379, %v371
        %v396 = vpack.c.b16 %v380, %v372
        %v397 = vpack.c.b16 %v381, %v373
        %v398 = vpack.c.b16 %v382, %v374
        %v399 = vpack.c.b16 %v383, %v375
        %v400 = vpack.c.b16 %v384, %v376
        %v401 = vpack.c.b16 %v385, %v377
        %vm418 = vcmask 261120
        %v420 = vsel %vm418, %v334, 0
        %v423 = vsel %vm418, %v335, 0
        %v426 = vsel %vm418, %v336, 0
        %v429 = vsel %vm418, %v337, 0
        %431 = vmatprep.subr.bf16.mxu0 %v387
        %432 = vmatpush1.bf16.msra.mxu0 %v386
        %433 = vmatprep.subr.bf16.mxu0 %v395
        %434 = vmatpush1.bf16.msra.mxu0 %v394
        %435 = vmatprep.subr.bf16.mxu0 0
        %436 = vmatpush1.bf16.msra.mxu0 0
        %437 = vmatprep.subr.bf16.mxu0 0
        %438 = vmatpush1.bf16.msra.mxu0 0
        %439 = vmatprep.subr.bf16.mxu0 0
        %440 = vmatpush1.bf16.msra.mxu0 0
        %441 = vmatprep.subr.bf16.mxu0 0
        %442 = vmatpush1.bf16.msra.mxu0 0
        %443 = vmatprep.subr.bf16.mxu0 0
        %444 = vmatpush1.bf16.msra.mxu0 0
        %445 = vmatprep.subr.bf16.mxu0 0
        %446 = vmatpush1.bf16.msra.mxu0 0
        %447 = vmatprep.subr.bf16.mxu0 0
        %448 = vmatpush1.bf16.msra.mxu0 0
        %449 = vmatprep.subr.bf16.mxu0 0
        %450 = vmatpush1.bf16.msra.mxu0 0
        %451 = vmatprep.subr.bf16.mxu0 0
        %452 = vmatpush1.bf16.msra.mxu0 0
        %453 = vmatprep.subr.bf16.mxu0 0
        %454 = vmatpush1.bf16.msra.mxu0 0
        %455 = vmatprep.subr.bf16.mxu0 0
        %456 = vmatpush1.bf16.msra.mxu0 0
        %457 = vmatprep.subr.bf16.mxu0 0
        %458 = vmatpush1.bf16.msra.mxu0 0
        %459 = vmatprep.subr.bf16.mxu0 0
        %460 = vmatpush1.bf16.msra.mxu0 0
        %461 = vmatprep.subr.bf16.mxu0 0
        %462 = vmatpush1.bf16.msra.mxu0 0
        %463 = vmatprep.mubr.bf16.mxu0 0
        %464 = vmatmul.mubr.bf16.gmra.mrb[0].mxu0 %v420
        %v465 = vpop.f32.mrb[0].mxu0
        %v466 = vadd.f32 %v281, %v465
        %v467 = vpop.f32.mrb[0].mxu0
        %v468 = vadd.f32 %v281, %v467
        %v469 = vpop.f32.mrb[0].mxu0
        %v470 = vadd.f32 %v286, %v469
        %v471 = vpop.f32.mrb[0].mxu0
        %v472 = vadd.f32 %v286, %v471
        %473 = vmatprep.mubr.bf16.mxu0 0
        %474 = vmatmul.mubr.bf16.gmra.mrb[0].mxu0 %v423
        %v475 = vpop.f32.mrb[0].mxu0
        %v476 = vadd.f32 %v291, %v475
        %v477 = vpop.f32.mrb[0].mxu0
        %v478 = vadd.f32 %v291, %v477
        %v479 = vpop.f32.mrb[0].mxu0
        %v480 = vadd.f32 %v296, %v479
        %v481 = vpop.f32.mrb[0].mxu0
        %v482 = vadd.f32 %v296, %v481
        %483 = vmatprep.mubr.bf16.mxu0 0
        %484 = vmatmul.mubr.bf16.gmra.mrb[0].mxu0 %v426
        %v485 = vpop.f32.mrb[0].mxu0
        %v486 = vadd.f32 %v301, %v485
        %v487 = vpop.f32.mrb[0].mxu0
        %v488 = vadd.f32 %v301, %v487
        %v489 = vpop.f32.mrb[0].mxu0
        %v490 = vadd.f32 %v306, %v489
        %v491 = vpop.f32.mrb[0].mxu0
        %v492 = vadd.f32 %v306, %v491
        %493 = vmatprep.mubr.bf16.mxu0 0
        %494 = vmatmul.mubr.bf16.gmra.mrb[0].mxu0 %v429
        %v495 = vpop.f32.mrb[0].mxu0
        %v496 = vadd.f32 %v311, %v495
        %v497 = vpop.f32.mrb[0].mxu0
        %v498 = vadd.f32 %v311, %v497
        %v499 = vpop.f32.mrb[0].mxu0
        %v500 = vadd.f32 %v316, %v499
        %v501 = vpop.f32.mrb[0].mxu0
        %v502 = vadd.f32 %v316, %v501
        %503 = vdwg.mxu0
        %504 = vmatprep.subr.bf16.mxu0 %v389
        %505 = vmatpush1.bf16.msra.mxu0 %v388
        %506 = vmatprep.subr.bf16.mxu0 %v397
        %507 = vmatpush1.bf16.msra.mxu0 %v396
        %508 = vmatprep.subr.bf16.mxu0 0
        %509 = vmatpush1.bf16.msra.mxu0 0
        %510 = vmatprep.subr.bf16.mxu0 0
        %511 = vmatpush1.bf16.msra.mxu0 0
        %512 = vmatprep.subr.bf16.mxu0 0
        %513 = vmatpush1.bf16.msra.mxu0 0
        %514 = vmatprep.subr.bf16.mxu0 0
        %515 = vmatpush1.bf16.msra.mxu0 0
        %516 = vmatprep.subr.bf16.mxu0 0
        %517 = vmatpush1.bf16.msra.mxu0 0
        %518 = vmatprep.subr.bf16.mxu0 0
        %519 = vmatpush1.bf16.msra.mxu0 0
        %520 = vmatprep.subr.bf16.mxu0 0
        %521 = vmatpush1.bf16.msra.mxu0 0
        %522 = vmatprep.subr.bf16.mxu0 0
        %523 = vmatpush1.bf16.msra.mxu0 0
        %524 = vmatprep.subr.bf16.mxu0 0
        %525 = vmatpush1.bf16.msra.mxu0 0
        %526 = vmatprep.subr.bf16.mxu0 0
        %527 = vmatpush1.bf16.msra.mxu0 0
        %528 = vmatprep.subr.bf16.mxu0 0
        %529 = vmatpush1.bf16.msra.mxu0 0
        %530 = vmatprep.subr.bf16.mxu0 0
        %531 = vmatpush1.bf16.msra.mxu0 0
        %532 = vmatprep.subr.bf16.mxu0 0
        %533 = vmatpush1.bf16.msra.mxu0 0
        %534 = vmatprep.subr.bf16.mxu0 0
        %535 = vmatpush1.bf16.msra.mxu0 0
        %536 = vmatprep.mubr.bf16.mxu0 0
        %537 = vmatmul.mubr.bf16.gmra.mrb[0].mxu0 %v420
        %v538 = vpop.f32.mrb[0].mxu0
        %v539 = vadd.f32 %v281, %v538
        %v540 = vpop.f32.mrb[0].mxu0
        %v541 = vadd.f32 %v281, %v540
        %v542 = vpop.f32.mrb[0].mxu0
        %v543 = vadd.f32 %v286, %v542
        %v544 = vpop.f32.mrb[0].mxu0
        %v545 = vadd.f32 %v286, %v544
        %546 = vmatprep.mubr.bf16.mxu0 0
        %547 = vmatmul.mubr.bf16.gmra.mrb[0].mxu0 %v423
        %v548 = vpop.f32.mrb[0].mxu0
        %v549 = vadd.f32 %v291, %v548
        %v550 = vpop.f32.mrb[0].mxu0
        %v551 = vadd.f32 %v291, %v550
        %v552 = vpop.f32.mrb[0].mxu0
        %v553 = vadd.f32 %v296, %v552
        %v554 = vpop.f32.mrb[0].mxu0
        %v555 = vadd.f32 %v296, %v554
        %556 = vmatprep.mubr.bf16.mxu0 0
        %557 = vmatmul.mubr.bf16.gmra.mrb[0].mxu0 %v426
        %v558 = vpop.f32.mrb[0].mxu0
        %v559 = vadd.f32 %v301, %v558
        %v560 = vpop.f32.mrb[0].mxu0
        %v561 = vadd.f32 %v301, %v560
        %v562 = vpop.f32.mrb[0].mxu0
        %v563 = vadd.f32 %v306, %v562
        %v564 = vpop.f32.mrb[0].mxu0
        %v565 = vadd.f32 %v306, %v564
        %566 = vmatprep.mubr.bf16.mxu0 0
        %567 = vmatmul.mubr.bf16.gmra.mrb[0].mxu0 %v429
        %v568 = vpop.f32.mrb[0].mxu0
        %v569 = vadd.f32 %v311, %v568
        %v570 = vpop.f32.mrb[0].mxu0
        %v571 = vadd.f32 %v311, %v570
        %v572 = vpop.f32.mrb[0].mxu0
        %v573 = vadd.f32 %v316, %v572
        %v574 = vpop.f32.mrb[0].mxu0
        %v575 = vadd.f32 %v316, %v574
        %576 = vdwg.mxu0
        %577 = vmatprep.subr.bf16.mxu0 %v391
        %578 = vmatpush1.bf16.msra.mxu0 %v390
        %579 = vmatprep.subr.bf16.mxu0 %v399
        %580 = vmatpush1.bf16.msra.mxu0 %v398
        %581 = vmatprep.subr.bf16.mxu0 0
        %582 = vmatpush1.bf16.msra.mxu0 0
        %583 = vmatprep.subr.bf16.mxu0 0
        %584 = vmatpush1.bf16.msra.mxu0 0
        %585 = vmatprep.subr.bf16.mxu0 0
        %586 = vmatpush1.bf16.msra.mxu0 0
        %587 = vmatprep.subr.bf16.mxu0 0
        %588 = vmatpush1.bf16.msra.mxu0 0
        %589 = vmatprep.subr.bf16.mxu0 0
        %590 = vmatpush1.bf16.msra.mxu0 0
        %591 = vmatprep.subr.bf16.mxu0 0
        %592 = vmatpush1.bf16.msra.mxu0 0
        %593 = vmatprep.subr.bf16.mxu0 0
        %594 = vmatpush1.bf16.msra.mxu0 0
        %595 = vmatprep.subr.bf16.mxu0 0
        %596 = vmatpush1.bf16.msra.mxu0 0
        %597 = vmatprep.subr.bf16.mxu0 0
        %598 = vmatpush1.bf16.msra.mxu0 0
        %599 = vmatprep.subr.bf16.mxu0 0
        %600 = vmatpush1.bf16.msra.mxu0 0
        %601 = vmatprep.subr.bf16.mxu0 0
        %602 = vmatpush1.bf16.msra.mxu0 0
        %603 = vmatprep.subr.bf16.mxu0 0
        %604 = vmatpush1.bf16.msra.mxu0 0
        %605 = vmatprep.subr.bf16.mxu0 0
        %606 = vmatpush1.bf16.msra.mxu0 0
        %607 = vmatprep.subr.bf16.mxu0 0
        %608 = vmatpush1.bf16.msra.mxu0 0
        %609 = vmatprep.mubr.bf16.mxu0 0
        %610 = vmatmul.mubr.bf16.gmra.mrb[0].mxu0 %v420
        %v611 = vpop.f32.mrb[0].mxu0
        %v612 = vadd.f32 %v281, %v611
        %v613 = vpop.f32.mrb[0].mxu0
        %v614 = vadd.f32 %v281, %v613
        %v615 = vpop.f32.mrb[0].mxu0
        %v616 = vadd.f32 %v286, %v615
        %v617 = vpop.f32.mrb[0].mxu0
        %v618 = vadd.f32 %v286, %v617
        %619 = vmatprep.mubr.bf16.mxu0 0
        %620 = vmatmul.mubr.bf16.gmra.mrb[0].mxu0 %v423
        %v621 = vpop.f32.mrb[0].mxu0
        %v622 = vadd.f32 %v291, %v621
        %v623 = vpop.f32.mrb[0].mxu0
        %v624 = vadd.f32 %v291, %v623
        %v625 = vpop.f32.mrb[0].mxu0
        %v626 = vadd.f32 %v296, %v625
        %v627 = vpop.f32.mrb[0].mxu0
        %v628 = vadd.f32 %v296, %v627
        %629 = vmatprep.mubr.bf16.mxu0 0
        %630 = vmatmul.mubr.bf16.gmra.mrb[0].mxu0 %v426
        %v631 = vpop.f32.mrb[0].mxu0
        %v632 = vadd.f32 %v301, %v631
        %v633 = vpop.f32.mrb[0].mxu0
        %v634 = vadd.f32 %v301, %v633
        %v635 = vpop.f32.mrb[0].mxu0
        %v636 = vadd.f32 %v306, %v635
        %v637 = vpop.f32.mrb[0].mxu0
        %v638 = vadd.f32 %v306, %v637
        %639 = vmatprep.mubr.bf16.mxu0 0
        %640 = vmatmul.mubr.bf16.gmra.mrb[0].mxu0 %v429
        %v641 = vpop.f32.mrb[0].mxu0
        %v642 = vadd.f32 %v311, %v641
        %v643 = vpop.f32.mrb[0].mxu0
        %v644 = vadd.f32 %v311, %v643
        %v645 = vpop.f32.mrb[0].mxu0
        %v646 = vadd.f32 %v316, %v645
        %v647 = vpop.f32.mrb[0].mxu0
        %v648 = vadd.f32 %v316, %v647
        %649 = vdwg.mxu0
        %650 = vmatprep.subr.bf16.mxu0 %v393
        %651 = vmatpush1.bf16.msra.mxu0 %v392
        %652 = vmatprep.subr.bf16.mxu0 %v401
        %653 = vmatpush1.bf16.msra.mxu0 %v400
        %654 = vmatprep.subr.bf16.mxu0 0
        %655 = vmatpush1.bf16.msra.mxu0 0
        %656 = vmatprep.subr.bf16.mxu0 0
        %657 = vmatpush1.bf16.msra.mxu0 0
        %658 = vmatprep.subr.bf16.mxu0 0
        %659 = vmatpush1.bf16.msra.mxu0 0
        %660 = vmatprep.subr.bf16.mxu0 0
        %661 = vmatpush1.bf16.msra.mxu0 0
        %662 = vmatprep.subr.bf16.mxu0 0
        %663 = vmatpush1.bf16.msra.mxu0 0
        %664 = vmatprep.subr.bf16.mxu0 0
        %665 = vmatpush1.bf16.msra.mxu0 0
        %666 = vmatprep.subr.bf16.mxu0 0
        %667 = vmatpush1.bf16.msra.mxu0 0
        %668 = vmatprep.subr.bf16.mxu0 0
        %669 = vmatpush1.bf16.msra.mxu0 0
        %670 = vmatprep.subr.bf16.mxu0 0
        %671 = vmatpush1.bf16.msra.mxu0 0
        %672 = vmatprep.subr.bf16.mxu0 0
        %673 = vmatpush1.bf16.msra.mxu0 0
        %674 = vmatprep.subr.bf16.mxu0 0
        %675 = vmatpush1.bf16.msra.mxu0 0
        %676 = vmatprep.subr.bf16.mxu0 0
        %677 = vmatpush1.bf16.msra.mxu0 0
        %678 = vmatprep.subr.bf16.mxu0 0
        %679 = vmatpush1.bf16.msra.mxu0 0
        %680 = vmatprep.subr.bf16.mxu0 0
        %681 = vmatpush1.bf16.msra.mxu0 0
        %682 = vmatprep.mubr.bf16.mxu0 0
        %683 = vmatmul.mubr.bf16.gmra.mrb[0].mxu0 %v420
        %v684 = vpop.f32.mrb[0].mxu0
        %v685 = vadd.f32 %v281, %v684
        %v686 = vpop.f32.mrb[0].mxu0
        %v687 = vadd.f32 %v281, %v686
        %v688 = vpop.f32.mrb[0].mxu0
        %v689 = vadd.f32 %v286, %v688
        %v690 = vpop.f32.mrb[0].mxu0
        %v691 = vadd.f32 %v286, %v690
        %692 = vmatprep.mubr.bf16.mxu0 0
        %693 = vmatmul.mubr.bf16.gmra.mrb[0].mxu0 %v423
        %v694 = vpop.f32.mrb[0].mxu0
        %v695 = vadd.f32 %v291, %v694
        %v696 = vpop.f32.mrb[0].mxu0
        %v697 = vadd.f32 %v291, %v696
        %v698 = vpop.f32.mrb[0].mxu0
        %v699 = vadd.f32 %v296, %v698
        %v700 = vpop.f32.mrb[0].mxu0
        %v701 = vadd.f32 %v296, %v700
        %702 = vmatprep.mubr.bf16.mxu0 0
        %703 = vmatmul.mubr.bf16.gmra.mrb[0].mxu0 %v426
        %v704 = vpop.f32.mrb[0].mxu0
        %v705 = vadd.f32 %v301, %v704
        %v706 = vpop.f32.mrb[0].mxu0
        %v707 = vadd.f32 %v301, %v706
        %v708 = vpop.f32.mrb[0].mxu0
        %v709 = vadd.f32 %v306, %v708
        %v710 = vpop.f32.mrb[0].mxu0
        %v711 = vadd.f32 %v306, %v710
        %712 = vmatprep.mubr.bf16.mxu0 0
        %713 = vmatmul.mubr.bf16.gmra.mrb[0].mxu0 %v429
        %v714 = vpop.f32.mrb[0].mxu0
        %v715 = vadd.f32 %v311, %v714
        %v716 = vpop.f32.mrb[0].mxu0
        %v717 = vadd.f32 %v311, %v716
        %v718 = vpop.f32.mrb[0].mxu0
        %v719 = vadd.f32 %v316, %v718
        %v720 = vpop.f32.mrb[0].mxu0
        %v721 = vadd.f32 %v316, %v720
        %722 = vdwg.mxu0
        %v723 = vmax.f32 %v466, 0.0
        %v724 = vmax.f32 %v468, 0.0
        %v725 = vmax.f32 %v539, 0.0
        %v726 = vmax.f32 %v541, 0.0
        %v727 = vmax.f32 %v612, 0.0
        %v728 = vmax.f32 %v614, 0.0
        %v729 = vmax.f32 %v685, 0.0
        %v730 = vmax.f32 %v687, 0.0
        %v731 = vmax.f32 %v470, 0.0
        %v732 = vmax.f32 %v472, 0.0
        %v733 = vmax.f32 %v543, 0.0
        %v734 = vmax.f32 %v545, 0.0
        %v735 = vmax.f32 %v616, 0.0
        %v736 = vmax.f32 %v618, 0.0
        %v737 = vmax.f32 %v689, 0.0
        %v738 = vmax.f32 %v691, 0.0
        %v739 = vmax.f32 %v476, 0.0
        %v740 = vmax.f32 %v478, 0.0
        %v741 = vmax.f32 %v549, 0.0
        %v742 = vmax.f32 %v551, 0.0
        %v743 = vmax.f32 %v622, 0.0
        %v744 = vmax.f32 %v624, 0.0
        %v745 = vmax.f32 %v695, 0.0
        %v746 = vmax.f32 %v697, 0.0
        %v747 = vmax.f32 %v480, 0.0
        %v748 = vmax.f32 %v482, 0.0
        %v749 = vmax.f32 %v553, 0.0
        %v750 = vmax.f32 %v555, 0.0
        %v751 = vmax.f32 %v626, 0.0
        %v752 = vmax.f32 %v628, 0.0
        %v753 = vmax.f32 %v699, 0.0
        %v754 = vmax.f32 %v701, 0.0
        %v755 = vmax.f32 %v486, 0.0
        %v756 = vmax.f32 %v488, 0.0
        %v757 = vmax.f32 %v559, 0.0
        %v758 = vmax.f32 %v561, 0.0
        %v759 = vmax.f32 %v632, 0.0
        %v760 = vmax.f32 %v634, 0.0
        %v761 = vmax.f32 %v705, 0.0
        %v762 = vmax.f32 %v707, 0.0
        %v763 = vmax.f32 %v490, 0.0
        %v764 = vmax.f32 %v492, 0.0
        %v765 = vmax.f32 %v563, 0.0
        %v766 = vmax.f32 %v565, 0.0
        %v767 = vmax.f32 %v636, 0.0
        %v768 = vmax.f32 %v638, 0.0
        %v769 = vmax.f32 %v709, 0.0
        %v770 = vmax.f32 %v711, 0.0
        %v771 = vmax.f32 %v496, 0.0
        %v772 = vmax.f32 %v498, 0.0
        %v773 = vmax.f32 %v569, 0.0
        %v774 = vmax.f32 %v571, 0.0
        %v775 = vmax.f32 %v642, 0.0
        %v776 = vmax.f32 %v644, 0.0
        %v777 = vmax.f32 %v715, 0.0
        %v778 = vmax.f32 %v717, 0.0
        %v779 = vmax.f32 %v500, 0.0
        %v780 = vmax.f32 %v502, 0.0
        %v781 = vmax.f32 %v573, 0.0
        %v782 = vmax.f32 %v575, 0.0
        %v783 = vmax.f32 %v646, 0.0
        %v784 = vmax.f32 %v648, 0.0
        %v785 = vmax.f32 %v719, 0.0
        %v786 = vmax.f32 %v721, 0.0
        %v787 = vld [vmem:[%s3] sm:$0xf]
        %v788 = vld [vmem:[%s3 + $0x4] sm:$0xf]
        %v789 = vpack.c.bf16 %v731, %v723
        %v790 = vpack.c.bf16 %v732, %v724
        %v791 = vpack.c.bf16 %v733, %v725
        %v792 = vpack.c.bf16 %v734, %v726
        %v793 = vpack.c.bf16 %v735, %v727
        %v794 = vpack.c.bf16 %v736, %v728
        %v795 = vpack.c.bf16 %v737, %v729
        %v796 = vpack.c.bf16 %v738, %v730
        %v797 = vpack.c.bf16 %v747, %v739
        %v798 = vpack.c.bf16 %v748, %v740
        %v799 = vpack.c.bf16 %v749, %v741
        %v800 = vpack.c.bf16 %v750, %v742
        %v801 = vpack.c.bf16 %v751, %v743
        %v802 = vpack.c.bf16 %v752, %v744
        %v803 = vpack.c.bf16 %v753, %v745
        %v804 = vpack.c.bf16 %v754, %v746
        %v805 = vpack.c.bf16 %v763, %v755
        %v806 = vpack.c.bf16 %v764, %v756
        %v807 = vpack.c.bf16 %v765, %v757
        %v808 = vpack.c.bf16 %v766, %v758
        %v809 = vpack.c.bf16 %v767, %v759
        %v810 = vpack.c.bf16 %v768, %v760
        %v811 = vpack.c.bf16 %v769, %v761
        %v812 = vpack.c.bf16 %v770, %v762
        %v813 = vpack.c.bf16 %v779, %v771
        %v814 = vpack.c.bf16 %v780, %v772
        %v815 = vpack.c.bf16 %v781, %v773
        %v816 = vpack.c.bf16 %v782, %v774
        %v817 = vpack.c.bf16 %v783, %v775
        %v818 = vpack.c.bf16 %v784, %v776
        %v819 = vpack.c.bf16 %v785, %v777
        %v820 = vpack.c.bf16 %v786, %v778
        %v821 = vld [vmem:[%s4] sm:$0xff]
        %v822 = vld [vmem:[%s4 + $0x8] sm:$0xff]
        %824 = vset.pattern.permute.xlu0 0
        %825 = vperm.xlu0 %824, %v821
        %v826 = vpop.permute.xlu0 %825
        %829 = vset.pattern.permute.xlu0 0
        %830 = vperm.xlu0 %829, %v822
        %v831 = vpop.permute.xlu0 %830
        %v835 = vunpack.c.l.b16 %v787
        %v836 = vunpack.c.l.b16 %v788
        %v837 = vpack.c.b16 %v836, %v835
        %vm838 = vcmask 523264
        %v840 = vsel %vm838, %v837, 0
        %842 = vmatprep.subr.bf16.mxu0 %v790
        %843 = vmatpush1.bf16.msra.mxu0 %v789
        %844 = vmatprep.subr.bf16.mxu0 %v798
        %845 = vmatpush1.bf16.msra.mxu0 %v797
        %846 = vmatprep.subr.bf16.mxu0 %v806
        %847 = vmatpush1.bf16.msra.mxu0 %v805
        %848 = vmatprep.subr.bf16.mxu0 %v814
        %849 = vmatpush1.bf16.msra.mxu0 %v813
        %850 = vmatprep.subr.bf16.mxu0 0
        %851 = vmatpush1.bf16.msra.mxu0 0
        %852 = vmatprep.subr.bf16.mxu0 0
        %853 = vmatpush1.bf16.msra.mxu0 0
        %854 = vmatprep.subr.bf16.mxu0 0
        %855 = vmatpush1.bf16.msra.mxu0 0
        %856 = vmatprep.subr.bf16.mxu0 0
        %857 = vmatpush1.bf16.msra.mxu0 0
        %858 = vmatprep.subr.bf16.mxu0 0
        %859 = vmatpush1.bf16.msra.mxu0 0
        %860 = vmatprep.subr.bf16.mxu0 0
        %861 = vmatpush1.bf16.msra.mxu0 0
        %862 = vmatprep.subr.bf16.mxu0 0
        %863 = vmatpush1.bf16.msra.mxu0 0
        %864 = vmatprep.subr.bf16.mxu0 0
        %865 = vmatpush1.bf16.msra.mxu0 0
        %866 = vmatprep.subr.bf16.mxu0 0
        %867 = vmatpush1.bf16.msra.mxu0 0
        %868 = vmatprep.subr.bf16.mxu0 0
        %869 = vmatpush1.bf16.msra.mxu0 0
        %870 = vmatprep.subr.bf16.mxu0 0
        %871 = vmatpush1.bf16.msra.mxu0 0
        %872 = vmatprep.subr.bf16.mxu0 0
        %873 = vmatpush1.bf16.msra.mxu0 0
        %874 = vmatprep.mubr.bf16.mxu0 0
        %875 = vmatmul.mubr.bf16.gmra.mrb[0].mxu0 %v840
        %v876 = vpop.f32.mrb[0].mxu0
        %v877 = vadd.f32 %v826, %v876
        %v878 = vpop.f32.mrb[0].mxu0
        %v879 = vadd.f32 %v826, %v878
        %v880 = vpop.f32.mrb[0].mxu0
        %v881 = vadd.f32 %v831, %v880
        %v882 = vpop.f32.mrb[0].mxu0
        %v883 = vadd.f32 %v831, %v882
        %884 = vdwg.mxu0
        %885 = vmatprep.subr.bf16.mxu0 %v792
        %886 = vmatpush1.bf16.msra.mxu0 %v791
        %887 = vmatprep.subr.bf16.mxu0 %v800
        %888 = vmatpush1.bf16.msra.mxu0 %v799
        %889 = vmatprep.subr.bf16.mxu0 %v808
        %890 = vmatpush1.bf16.msra.mxu0 %v807
        %891 = vmatprep.subr.bf16.mxu0 %v816
        %892 = vmatpush1.bf16.msra.mxu0 %v815
        %893 = vmatprep.subr.bf16.mxu0 0
        %894 = vmatpush1.bf16.msra.mxu0 0
        %895 = vmatprep.subr.bf16.mxu0 0
        %896 = vmatpush1.bf16.msra.mxu0 0
        %897 = vmatprep.subr.bf16.mxu0 0
        %898 = vmatpush1.bf16.msra.mxu0 0
        %899 = vmatprep.subr.bf16.mxu0 0
        %900 = vmatpush1.bf16.msra.mxu0 0
        %901 = vmatprep.subr.bf16.mxu0 0
        %902 = vmatpush1.bf16.msra.mxu0 0
        %903 = vmatprep.subr.bf16.mxu0 0
        %904 = vmatpush1.bf16.msra.mxu0 0
        %905 = vmatprep.subr.bf16.mxu0 0
        %906 = vmatpush1.bf16.msra.mxu0 0
        %907 = vmatprep.subr.bf16.mxu0 0
        %908 = vmatpush1.bf16.msra.mxu0 0
        %909 = vmatprep.subr.bf16.mxu0 0
        %910 = vmatpush1.bf16.msra.mxu0 0
        %911 = vmatprep.subr.bf16.mxu0 0
        %912 = vmatpush1.bf16.msra.mxu0 0
        %913 = vmatprep.subr.bf16.mxu0 0
        %914 = vmatpush1.bf16.msra.mxu0 0
        %915 = vmatprep.subr.bf16.mxu0 0
        %916 = vmatpush1.bf16.msra.mxu0 0
        %917 = vmatprep.mubr.bf16.mxu0 0
        %918 = vmatmul.mubr.bf16.gmra.mrb[0].mxu0 %v840
        %v919 = vpop.f32.mrb[0].mxu0
        %v920 = vadd.f32 %v826, %v919
        %v921 = vpop.f32.mrb[0].mxu0
        %v922 = vadd.f32 %v826, %v921
        %v923 = vpop.f32.mrb[0].mxu0
        %v924 = vadd.f32 %v831, %v923
        %v925 = vpop.f32.mrb[0].mxu0
        %v926 = vadd.f32 %v831, %v925
        %927 = vdwg.mxu0
        %928 = vmatprep.subr.bf16.mxu0 %v794
        %929 = vmatpush1.bf16.msra.mxu0 %v793
        %930 = vmatprep.subr.bf16.mxu0 %v802
        %931 = vmatpush1.bf16.msra.mxu0 %v801
        %932 = vmatprep.subr.bf16.mxu0 %v810
        %933 = vmatpush1.bf16.msra.mxu0 %v809
        %934 = vmatprep.subr.bf16.mxu0 %v818
        %935 = vmatpush1.bf16.msra.mxu0 %v817
        %936 = vmatprep.subr.bf16.mxu0 0
        %937 = vmatpush1.bf16.msra.mxu0 0
        %938 = vmatprep.subr.bf16.mxu0 0
        %939 = vmatpush1.bf16.msra.mxu0 0
        %940 = vmatprep.subr.bf16.mxu0 0
        %941 = vmatpush1.bf16.msra.mxu0 0
        %942 = vmatprep.subr.bf16.mxu0 0
        %943 = vmatpush1.bf16.msra.mxu0 0
        %944 = vmatprep.subr.bf16.mxu0 0
        %945 = vmatpush1.bf16.msra.mxu0 0
        %946 = vmatprep.subr.bf16.mxu0 0
        %947 = vmatpush1.bf16.msra.mxu0 0
        %948 = vmatprep.subr.bf16.mxu0 0
        %949 = vmatpush1.bf16.msra.mxu0 0
        %950 = vmatprep.subr.bf16.mxu0 0
        %951 = vmatpush1.bf16.msra.mxu0 0
        %952 = vmatprep.subr.bf16.mxu0 0
        %953 = vmatpush1.bf16.msra.mxu0 0
        %954 = vmatprep.subr.bf16.mxu0 0
        %955 = vmatpush1.bf16.msra.mxu0 0
        %956 = vmatprep.subr.bf16.mxu0 0
        %957 = vmatpush1.bf16.msra.mxu0 0
        %958 = vmatprep.subr.bf16.mxu0 0
        %959 = vmatpush1.bf16.msra.mxu0 0
        %960 = vmatprep.mubr.bf16.mxu0 0
        %961 = vmatmul.mubr.bf16.gmra.mrb[0].mxu0 %v840
        %v962 = vpop.f32.mrb[0].mxu0
        %v963 = vadd.f32 %v826, %v962
        %v964 = vpop.f32.mrb[0].mxu0
        %v965 = vadd.f32 %v826, %v964
        %v966 = vpop.f32.mrb[0].mxu0
        %v967 = vadd.f32 %v831, %v966
        %v968 = vpop.f32.mrb[0].mxu0
        %v969 = vadd.f32 %v831, %v968
        %970 = vdwg.mxu0
        %971 = vmatprep.subr.bf16.mxu0 %v796
        %972 = vmatpush1.bf16.msra.mxu0 %v795
        %973 = vmatprep.subr.bf16.mxu0 %v804
        %974 = vmatpush1.bf16.msra.mxu0 %v803
        %975 = vmatprep.subr.bf16.mxu0 %v812
        %976 = vmatpush1.bf16.msra.mxu0 %v811
        %977 = vmatprep.subr.bf16.mxu0 %v820
        %978 = vmatpush1.bf16.msra.mxu0 %v819
        %979 = vmatprep.subr.bf16.mxu0 0
        %980 = vmatpush1.bf16.msra.mxu0 0
        %981 = vmatprep.subr.bf16.mxu0 0
        %982 = vmatpush1.bf16.msra.mxu0 0
        %983 = vmatprep.subr.bf16.mxu0 0
        %984 = vmatpush1.bf16.msra.mxu0 0
        %985 = vmatprep.subr.bf16.mxu0 0
        %986 = vmatpush1.bf16.msra.mxu0 0
        %987 = vmatprep.subr.bf16.mxu0 0
        %988 = vmatpush1.bf16.msra.mxu0 0
        %989 = vmatprep.subr.bf16.mxu0 0
        %990 = vmatpush1.bf16.msra.mxu0 0
        %991 = vmatprep.subr.bf16.mxu0 0
        %992 = vmatpush1.bf16.msra.mxu0 0
        %993 = vmatprep.subr.bf16.mxu0 0
        %994 = vmatpush1.bf16.msra.mxu0 0
        %995 = vmatprep.subr.bf16.mxu0 0
        %996 = vmatpush1.bf16.msra.mxu0 0
        %997 = vmatprep.subr.bf16.mxu0 0
        %998 = vmatpush1.bf16.msra.mxu0 0
        %999 = vmatprep.subr.bf16.mxu0 0
        %1000 = vmatpush1.bf16.msra.mxu0 0
        %1001 = vmatprep.subr.bf16.mxu0 0
        %1002 = vmatpush1.bf16.msra.mxu0 0
        %1003 = vmatprep.mubr.bf16.mxu0 0
        %1004 = vmatmul.mubr.bf16.gmra.mrb[0].mxu0 %v840
        %v1005 = vpop.f32.mrb[0].mxu0
        %v1006 = vadd.f32 %v826, %v1005
        %v1007 = vpop.f32.mrb[0].mxu0
        %v1008 = vadd.f32 %v826, %v1007
        %v1009 = vpop.f32.mrb[0].mxu0
        %v1010 = vadd.f32 %v831, %v1009
        %v1011 = vpop.f32.mrb[0].mxu0
        %v1012 = vadd.f32 %v831, %v1011
        %1013 = vdwg.mxu0
        %1014 = vst [vmem:[%s242] sm:$0xff] %v877
        %1015 = vst [vmem:[%s242 + $0x8] sm:$0xff] %v879
        %1016 = vst [vmem:[%s242 + $0x10] sm:$0xff] %v920
        %1017 = vst [vmem:[%s242 + $0x18] sm:$0xff] %v922
        %1018 = vst [vmem:[%s242 + $0x20] sm:$0xff] %v963
        %1019 = vst [vmem:[%s242 + $0x28] sm:$0xff] %v965
        %1020 = vst [vmem:[%s242 + $0x30] sm:$0xff] %v1006
        %1021 = vst [vmem:[%s242 + $0x38] sm:$0xff] %v1008
        %1022 = vst [vmem:[%s242 + $0x40] sm:$0xff] %v881
        %1023 = vst [vmem:[%s242 + $0x48] sm:$0xff] %v883
        %1024 = vst [vmem:[%s242 + $0x50] sm:$0xff] %v924
        %1025 = vst [vmem:[%s242 + $0x58] sm:$0xff] %v926
        %1026 = vst [vmem:[%s242 + $0x60] sm:$0xff] %v967
        %1027 = vst [vmem:[%s242 + $0x68] sm:$0xff] %v969
        %1028 = vst [vmem:[%s242 + $0x70] sm:$0xff] %v1010
        %1029 = vst [vmem:[%s242 + $0x78] sm:$0xff] %v1012
        %s1030 = sand.u32 %s140, 1
        %s1031 = scalar_lea.sflag [#allocation4], %s1030
        %s1032 = sand.u32 %s140, 1
        %s1033 = smul.addr %s1032, 128
        %s1034 = scalar_lea.vmem [#allocation5], %s1033
        // Predicated region
        $region45: #{tpu_custom_call.1} parent=39 // pred_check
          %p1035 = pneg %p150
        $region46: #{tpu_custom_call.1} parent=39 // pred_check_branch
          %1037 = sbr.rel (%p1035) target = $region48
        $region47: #{tpu_custom_call.1} parent=39 // pred_region
          %s1038 = smul.u32 8, %s22
          %s1040 = ssub.s32 2048, 2048
          %1041 = vsyncadd %s1031, %s1040
          %s1042 = smul.addr %s1038, 128
          %s1043 = scalar_lea.hbm %s5, %s1042
          %s1044 = sshll.u32 %s1034, 4
          %s1045 = int_to_ptr.vmem [resolvable:$true] %s1044
          %1050 = dma.vmem_to_hbm [thread:$0]  %s1045, 2048, %s1043, %s1031, 1024, 2048, 64
        $region48: #{tpu_custom_call.1} parent=39 // pred_fallthru
          _
      $region40: #{tpu_custom_call.1} parent=5 // pred_fallthru
        _
      %p1051 = scmp.le.s32.totalorder 2, %s17
      // Predicated region
      $region49: #{tpu_custom_call.1} parent=5 // pred_check
        %p1052 = pneg %p1051
      $region50: #{tpu_custom_call.1} parent=5 // pred_check_branch
        %1054 = sbr.rel (%p1052) target = $region52
      $region51: #{tpu_custom_call.1} parent=5 // pred_region
        %s1055 = ssub.s32 %s17, 2
        // Predicated region
        $region53: #{tpu_custom_call.1} parent=51 // pred_check
          %p1056 = pneg %p156
        $region54: #{tpu_custom_call.1} parent=51 // pred_check_branch
          %1058 = sbr.rel (%p1056) target = $region56
        $region55: #{tpu_custom_call.1} parent=51 // pred_region
          %s1059 = sand.u32 %s141, 1
          %s1060 = scalar_lea.sflag [#allocation4], %s1059
          %s1061 = sand.u32 %s141, 1
          %s1062 = smul.addr %s1061, 128
          %s1063 = scalar_lea.vmem [#allocation5], %s1062
          %1064 = dma.done %s1060, 2048
        $region56: #{tpu_custom_call.1} parent=51 // pred_fallthru
          _
      $region52: #{tpu_custom_call.1} parent=5 // pred_fallthru
        _
    $region6: #{tpu_custom_call.1} parent=1 // loop_footer
      %s21 = sadd.s32 1, %s17
    $region7: #{tpu_custom_call.1} parent=1 // loop_footer_branch
      %16 = sbr.rel target = $region3
    $region8: #{tpu_custom_call.1} parent=1 // loop_exit
      _
    %1065 = vsyncpa [#allocation3], 1
    %s1066 = scalar_lea.sflag [#allocation3], 1
    %1067 = vsyncpa %s1066, 1
    %1068 = vsyncpa [#allocation4], 1
    %s1069 = scalar_lea.sflag [#allocation4], 1
    %1070 = vsyncpa %s1069, 1

</llo_original>
